<compile_context>
chip_gen: v7x
topology: tpu7x:2x2x1
jax: 0.10.0
libtpu: 0.0.40
codegen_flags: <defaults>
</compile_context>

<pallas_src>
import functools

import jax
import jax.numpy as jnp
from jax.experimental import pallas as pl
from jax.experimental.pallas import tpu as pltpu


def _round_up(n, m):
    return ((n + m - 1) // m) * m


def _cdiv(a, b):
    return (a + b - 1) // b


def actor_kernel(x_ref, w1_ref, b1_ref, w2_ref, b2_ref, o_ref):
    # fc1 + ReLU  (MXU matmul, f32 accumulate; bias/ReLU in f32)
    h = jnp.dot(x_ref[...], w1_ref[...], preferred_element_type=jnp.float32)
    h = jnp.maximum(h + b1_ref[...], 0.0)

    # fc2 (cast back to the matmul operand dtype; no-op when operands are f32)
    logits = jnp.dot(h.astype(w2_ref.dtype), w2_ref[...],
                     preferred_element_type=jnp.float32)
    logits = logits + b2_ref[...]

    # Numerically stable softmax over the (unpadded) action dim.
    # Exact divide so each row sums to 1 to f32 rounding.
    m = jnp.max(logits, axis=-1, keepdims=True)
    e = jnp.exp(logits - m)
    denom = jnp.sum(e, axis=-1, keepdims=True)
    o_ref[...] = (e / denom).astype(o_ref.dtype)


def prepare_actor_params(w1, b1, w2, b2, matmul_dtype=jnp.bfloat16):
    """Optional: pre-cast params once outside the hot loop (makes the in-call
    .astype() a no-op)."""
    return (w1.astype(matmul_dtype), b1.astype(jnp.float32),
            w2.astype(matmul_dtype), b2.astype(jnp.float32))


@functools.partial(jax.jit, static_argnames=("block_b", "matmul_dtype"))
def actor_forward(x, w1, b1, w2, b2, *, block_b=512, matmul_dtype=jnp.bfloat16):
    """softmax(relu(x @ w1 + b1) @ w2 + b2, axis=1) via a batch-tiled Pallas kernel.

    x: [B, S]   w1: [S, H]   b1: [1, H]   w2: [H, A]   b2: [1, A]
    """
    B, S = x.shape
    H = w1.shape[1]
    A = w2.shape[1]

    # Batch padded to a sublane multiple only if needed; feature dims unpadded.
    B_pad = _round_up(B, 8)
    bb = min(_round_up(block_b, 8), B_pad)

    # v7x: keep >= 2 grid steps when the batch allows, so both TensorCores are used.
    if B_pad // bb < 2 and B_pad >= 16:
        bb = _round_up(_cdiv(B_pad, 2), 8)

    # VMEM budget clamp (v5e scoped default is 16 MiB; v7x physical VMEM 64 MiB):
    # double-buffered x/out tiles + f32 h temporary + f32 logits per batch row.
    x_bytes = jnp.finfo(matmul_dtype).bits // 8
    per_row = 2 * (S * x_bytes + A * 4) + (H + A) * 4
    bb = min(bb, max(8, (10 * 1024 * 1024 // per_row) // 8 * 8))

    xp = x.astype(matmul_dtype)
    if B_pad != B:
        xp = jnp.pad(xp, ((0, B_pad - B), (0, 0)))

    grid = (_cdiv(B_pad, bb),)

    out = pl.pallas_call(
        actor_kernel,
        out_shape=jax.ShapeDtypeStruct((B_pad, A), jnp.float32),
        grid=grid,
        in_specs=[
            pl.BlockSpec((bb, S), lambda i: (i, 0)),   # x: tiled over batch
            pl.BlockSpec((S, H), lambda i: (0, 0)),    # W1: resident (full extent)
            pl.BlockSpec((1, H), lambda i: (0, 0)),    # b1: resident, f32
            pl.BlockSpec((H, A), lambda i: (0, 0)),    # W2: resident (full extent)
            pl.BlockSpec((1, A), lambda i: (0, 0)),    # b2: resident, f32
        ],
        out_specs=pl.BlockSpec((bb, A), lambda i: (i, 0)),  # unpadded A columns
        compiler_params=pltpu.CompilerParams(
            dimension_semantics=("parallel",),
        ),
    )(xp,
      w1.astype(matmul_dtype), b1.astype(jnp.float32),
      w2.astype(matmul_dtype), b2.astype(jnp.float32))

    if B_pad != B:           # skipped entirely when B is already a multiple of 8
        out = out[:B]
    return out


def actor_reference(x, w1, b1, w2, b2, matmul_dtype=jnp.float32):
    """Pure-JAX reference mirroring the kernel's operand dtypes."""
    h = jnp.dot(x.astype(matmul_dtype), w1.astype(matmul_dtype),
                preferred_element_type=jnp.float32) + b1
    h = jnp.maximum(h, 0.0)
    logits = jnp.dot(h.astype(matmul_dtype), w2.astype(matmul_dtype),
                     preferred_element_type=jnp.float32) + b2
    return jax.nn.softmax(logits, axis=1)


def init_actor_params(key, state_size, hidden_size, action_size):
    # Mimics torch.nn.Linear default init: U(-1/sqrt(fan_in), +1/sqrt(fan_in)).
    k1, k2, k3, k4 = jax.random.split(key, 4)
    lim1 = 1.0 / jnp.sqrt(jnp.float32(state_size))
    lim2 = 1.0 / jnp.sqrt(jnp.float32(hidden_size))
    w1 = jax.random.uniform(k1, (state_size, hidden_size), jnp.float32, -lim1, lim1)
    b1 = jax.random.uniform(k2, (1, hidden_size), jnp.float32, -lim1, lim1)
    w2 = jax.random.uniform(k3, (hidden_size, action_size), jnp.float32, -lim2, lim2)
    b2 = jax.random.uniform(k4, (1, action_size), jnp.float32, -lim2, lim2)
    return w1, b1, w2, b2


if __name__ == "__main__":
    key = jax.random.PRNGKey(0)
    k_x, k_p = jax.random.split(key)

    batch = 4
    state_size = 16
    hidden_size = 32
    action_size = 8

    x = jax.random.normal(k_x, (batch, state_size), jnp.float32)
    w1, b1, w2, b2 = init_actor_params(k_p, state_size, hidden_size, action_size)

    # Default config: bf16 matmul operands (MXU-native on v5e/v6e/v7x), f32 math.
    out_bf16 = actor_forward(x, w1, b1, w2, b2)
    jax.block_until_ready(out_bf16)
    ref_bf16 = actor_reference(x, w1, b1, w2, b2, jnp.bfloat16)
    assert out_bf16.shape == (batch, action_size)
    assert jnp.allclose(out_bf16, ref_bf16, atol=2e-2, rtol=2e-2)
    # Exact divide -> rows sum to 1 to f32 rounding regardless of operand dtype.
    assert jnp.allclose(jnp.sum(out_bf16, axis=1), 1.0, atol=1e-5)

    # f32 matmul operands (safe on every TPU generation).
    out_f32 = actor_forward(x, w1, b1, w2, b2, matmul_dtype=jnp.float32)
    jax.block_until_ready(out_f32)
    ref_f32 = actor_reference(x, w1, b1, w2, b2, jnp.float32)
    assert out_f32.shape == (batch, action_size)
    assert jnp.allclose(out_f32, ref_f32, atol=1e-2, rtol=1e-2)
    assert jnp.allclose(jnp.sum(out_f32, axis=1), 1.0, atol=1e-5)

    print("KERNEL_OK")
</pallas_src>

<mosaic_0001>
module attributes {stable_mosaic.version = 11 : i64} {
  func.func @actor_kernel(%arg0: i32, %arg1: memref<8x16xbf16, #tpu.memory_space<vmem>>, %arg2: memref<16x32xbf16, #tpu.memory_space<vmem>>, %arg3: memref<1x32xf32, #tpu.memory_space<vmem>>, %arg4: memref<32x8xbf16, #tpu.memory_space<vmem>>, %arg5: memref<1x8xf32, #tpu.memory_space<vmem>>, %arg6: memref<8x8xf32, #tpu.memory_space<vmem>>) attributes {dimension_semantics = [#tpu.dimension_semantics<parallel>], iteration_bounds = array<i64: 1>, scalar_prefetch = 0 : i64, scratch_operands = 0 : i64, tpu.core_type = #tpu.core_type<tc>, window_params = [{transform_indices = @transform_0, window_bounds = array<i64: 8, 16>}, {pipeline_mode = #tpu.pipeline_mode<synchronous>, transform_indices = @transform_1, window_bounds = array<i64: 16, 32>}, {pipeline_mode = #tpu.pipeline_mode<synchronous>, transform_indices = @transform_2, window_bounds = array<i64: 1, 32>}, {pipeline_mode = #tpu.pipeline_mode<synchronous>, transform_indices = @transform_3, window_bounds = array<i64: 32, 8>}, {pipeline_mode = #tpu.pipeline_mode<synchronous>, transform_indices = @transform_4, window_bounds = array<i64: 1, 8>}, {transform_indices = @transform_5, window_bounds = array<i64: 8, 8>}]} {
    %c0 = arith.constant 0 : index
    %c0_0 = arith.constant 0 : index
    %0 = vector.load %arg1[%c0, %c0_0] : memref<8x16xbf16, #tpu.memory_space<vmem>>, vector<8x16xbf16>
    %c0_1 = arith.constant 0 : index
    %c0_2 = arith.constant 0 : index
    %1 = vector.load %arg2[%c0_1, %c0_2] : memref<16x32xbf16, #tpu.memory_space<vmem>>, vector<16x32xbf16>
    %cst = arith.constant dense<0.000000e+00> : vector<8x32xf32>
    %2 = tpu.matmul %0, %1, %cst {dimension_numbers = #tpu.dot_dimension_numbers<[1], [0], [0], [1], [0, 0, 1, 1], [], []>} : vector<8x16xbf16>, vector<16x32xbf16>, vector<8x32xf32> -> vector<8x32xf32>
    %c0_3 = arith.constant 0 : index
    %c0_4 = arith.constant 0 : index
    %3 = vector.load %arg3[%c0_3, %c0_4] : memref<1x32xf32, #tpu.memory_space<vmem>>, vector<1x32xf32>
    %4 = vector.broadcast %3 : vector<1x32xf32> to vector<8x32xf32>
    %5 = arith.addf %2, %4 : vector<8x32xf32>
    %cst_5 = arith.constant 0.000000e+00 : f32
    %6 = vector.broadcast %cst_5 : f32 to vector<8x32xf32>
    %7 = arith.maximumf %5, %6 : vector<8x32xf32>
    %8 = arith.truncf %7 : vector<8x32xf32> to vector<8x32xbf16>
    %c0_6 = arith.constant 0 : index
    %c0_7 = arith.constant 0 : index
    %9 = vector.load %arg4[%c0_6, %c0_7] : memref<32x8xbf16, #tpu.memory_space<vmem>>, vector<32x8xbf16>
    %cst_8 = arith.constant dense<0.000000e+00> : vector<8x8xf32>
    %10 = tpu.matmul %8, %9, %cst_8 {dimension_numbers = #tpu.dot_dimension_numbers<[1], [0], [0], [1], [0, 0, 1, 1], [], []>} : vector<8x32xbf16>, vector<32x8xbf16>, vector<8x8xf32> -> vector<8x8xf32>
    %c0_9 = arith.constant 0 : index
    %c0_10 = arith.constant 0 : index
    %11 = vector.load %arg5[%c0_9, %c0_10] : memref<1x8xf32, #tpu.memory_space<vmem>>, vector<1x8xf32>
    %12 = vector.broadcast %11 : vector<1x8xf32> to vector<8x8xf32>
    %13 = arith.addf %10, %12 : vector<8x8xf32>
    %cst_11 = arith.constant dense<0xFF800000> : vector<8xf32>
    %14 = vector.multi_reduction <maximumf>, %13, %cst_11 [1] : vector<8x8xf32> to vector<8xf32>
    %15 = vector.shape_cast %14 : vector<8xf32> to vector<8x1xf32>
    %16 = vector.broadcast %15 : vector<8x1xf32> to vector<8x8xf32>
    %17 = arith.subf %13, %16 : vector<8x8xf32>
    %18 = math.exp %17 : vector<8x8xf32>
    %cst_12 = arith.constant dense<0.000000e+00> : vector<8xf32>
    %19 = vector.multi_reduction <add>, %18, %cst_12 [1] : vector<8x8xf32> to vector<8xf32>
    %20 = vector.shape_cast %19 : vector<8xf32> to vector<8x1xf32>
    %21 = vector.broadcast %20 : vector<8x1xf32> to vector<8x8xf32>
    %22 = arith.divf %18, %21 : vector<8x8xf32>
    %c0_13 = arith.constant 0 : index
    %c0_14 = arith.constant 0 : index
    %23 = vector.load %arg6[%c0_13, %c0_14] : memref<8x8xf32, #tpu.memory_space<vmem>>, vector<8x8xf32>
    tpu.vector_store %arg6[%c0_13, %c0_14], %22 {strides = array<i32>} : memref<8x8xf32, #tpu.memory_space<vmem>>, vector<8x8xf32>,
    return
  }
  func.func @transform_0(%arg0: i32) -> (i32, i32) {
    %c0_i32 = arith.constant 0 : i32
    %c0_i32_0 = arith.constant 0 : i32
    return %arg0, %c0_i32 : i32, i32
  }
  func.func @transform_1(%arg0: i32) -> (i32, i32) {
    %c0_i32 = arith.constant 0 : i32
    %c0_i32_0 = arith.constant 0 : i32
    %c0_i32_1 = arith.constant 0 : i32
    return %c0_i32, %c0_i32_0 : i32, i32
  }
  func.func @transform_2(%arg0: i32) -> (i32, i32) {
    %c0_i32 = arith.constant 0 : i32
    %c0_i32_0 = arith.constant 0 : i32
    %c0_i32_1 = arith.constant 0 : i32
    return %c0_i32, %c0_i32_0 : i32, i32
  }
  func.func @transform_3(%arg0: i32) -> (i32, i32) {
    %c0_i32 = arith.constant 0 : i32
    %c0_i32_0 = arith.constant 0 : i32
    %c0_i32_1 = arith.constant 0 : i32
    return %c0_i32, %c0_i32_0 : i32, i32
  }
  func.func @transform_4(%arg0: i32) -> (i32, i32) {
    %c0_i32 = arith.constant 0 : i32
    %c0_i32_0 = arith.constant 0 : i32
    %c0_i32_1 = arith.constant 0 : i32
    return %c0_i32, %c0_i32_0 : i32, i32
  }
  func.func @transform_5(%arg0: i32) -> (i32, i32) {
    %c0_i32 = arith.constant 0 : i32
    %c0_i32_0 = arith.constant 0 : i32
    return %arg0, %c0_i32 : i32, i32
  }
}

</mosaic_0001>

<llo_original>
// kernel: actor_forward.1
$region0: #{actor_forward.1}
  #allocation0 [shape = 'u32[]', space=smem, size = 0x4, offset = 0x4, fixed_abs, tag = 'smem constant byte address 0x4 - core index']
  #allocation1 [shape = 'u32[144,128]{1,0:T(1,128)}', space=vmem, size = 0x12000, scoped, tag = 'internal scratch']
  %s0 = inlined_call_operand.vmem [shape: bf16[8,16], index: 0, kind: input, shape index: {}]
  %s1 = inlined_call_operand.vmem [shape: bf16[16,32], index: 1, kind: input, shape index: {}]
  %s2 = inlined_call_operand.vmem [shape: f32[1,32], index: 2, kind: input, shape index: {}]
  %s3 = inlined_call_operand.vmem [shape: bf16[32,8], index: 3, kind: input, shape index: {}]
  %s4 = inlined_call_operand.vmem [shape: f32[1,8], index: 4, kind: input, shape index: {}]
  %s5 = inlined_call_operand.vmem [shape: f32[8,8], index: 5, kind: output, shape index: {}]
  %s6 = sld [smem:[#allocation0]]
  $region30: #{actor_forward.1} parent=0
    _
  %s8 = ssub.s32 1, %s6
  %s9 = scalar_select 0, %s8, %s6
  // Predicated region
  $region2: #{actor_forward.1} parent=0 // pred_check
    _
  $region3: #{actor_forward.1} parent=0 // pred_check_branch
    %11 = sbr.rel (0) target = $region5
  $region4: #{actor_forward.1} parent=0 // pred_region
    _
  $region5: #{actor_forward.1} parent=0 // pred_fallthru
    _
  // Predicated region
  $region6: #{actor_forward.1} parent=0 // pred_check
    _
  $region7: #{actor_forward.1} parent=0 // pred_check_branch
    %13 = sbr.rel (0) target = $region9
  $region8: #{actor_forward.1} parent=0 // pred_region
    _
  $region9: #{actor_forward.1} parent=0 // pred_fallthru
    _
  // Predicated region
  $region10: #{actor_forward.1} parent=0 // pred_check
    _
  $region11: #{actor_forward.1} parent=0 // pred_check_branch
    %15 = sbr.rel (0) target = $region13
  $region12: #{actor_forward.1} parent=0 // pred_region
    _
  $region13: #{actor_forward.1} parent=0 // pred_fallthru
    _
  // Predicated region
  $region14: #{actor_forward.1} parent=0 // pred_check
    _
  $region15: #{actor_forward.1} parent=0 // pred_check_branch
    %17 = sbr.rel (0) target = $region17
  $region16: #{actor_forward.1} parent=0 // pred_region
    _
  $region17: #{actor_forward.1} parent=0 // pred_fallthru
    _
  // Predicated region
  $region18: #{actor_forward.1} parent=0 // pred_check
    _
  $region19: #{actor_forward.1} parent=0 // pred_check_branch
    %19 = sbr.rel (0) target = $region21
  $region20: #{actor_forward.1} parent=0 // pred_region
    _
  $region21: #{actor_forward.1} parent=0 // pred_fallthru
    _
  %v21 = vld [vmem:[%s0] sm:$0xf]
  %v22 = vld [vmem:[%s1] sm:$0xf]
  %v23 = vld [vmem:[%s1 + $0x4] sm:$0xf]
  %v24 = vld [vmem:[%s2] sm:$0x1]
  %v26 = vlaneseq
  %v27 = vshrl.u32 %v26, 7
  %v28 = vsub.s32 0, %v27
  %v29 = vrot.slane %v24, %v28
  %v33 = vunpack.c.l.b16 %v22
  %v34 = vunpack.c.l.b16 %v23
  %v35 = vpack.c.b16 %v34, %v33
  %vm37 = vcmask 130048
  %v39 = vsel %vm37, %v21, 0
  %41 = vmatprep.subr.bf16.mxu0 0
  %42 = vmatpush1.bf16.msra.mxu0 %v35
  %43 = vmatprep.subr.bf16.mxu0 0
  %44 = vmatpush1.bf16.msra.mxu0 0
  %45 = vmatprep.subr.bf16.mxu0 0
  %46 = vmatpush1.bf16.msra.mxu0 0
  %47 = vmatprep.subr.bf16.mxu0 0
  %48 = vmatpush1.bf16.msra.mxu0 0
  %49 = vmatprep.subr.bf16.mxu0 0
  %50 = vmatpush1.bf16.msra.mxu0 0
  %51 = vmatprep.subr.bf16.mxu0 0
  %52 = vmatpush1.bf16.msra.mxu0 0
  %53 = vmatprep.subr.bf16.mxu0 0
  %54 = vmatpush1.bf16.msra.mxu0 0
  %55 = vmatprep.subr.bf16.mxu0 0
  %56 = vmatpush1.bf16.msra.mxu0 0
  %57 = vmatprep.subr.bf16.mxu0 0
  %58 = vmatpush1.bf16.msra.mxu0 0
  %59 = vmatprep.subr.bf16.mxu0 0
  %60 = vmatpush1.bf16.msra.mxu0 0
  %61 = vmatprep.subr.bf16.mxu0 0
  %62 = vmatpush1.bf16.msra.mxu0 0
  %63 = vmatprep.subr.bf16.mxu0 0
  %64 = vmatpush1.bf16.msra.mxu0 0
  %65 = vmatprep.subr.bf16.mxu0 0
  %66 = vmatpush1.bf16.msra.mxu0 0
  %67 = vmatprep.subr.bf16.mxu0 0
  %68 = vmatpush1.bf16.msra.mxu0 0
  %69 = vmatprep.subr.bf16.mxu0 0
  %70 = vmatpush1.bf16.msra.mxu0 0
  %71 = vmatprep.subr.bf16.mxu0 0
  %72 = vmatpush1.bf16.msra.mxu0 0
  %73 = vmatprep.mubr.bf16.mxu0 0
  %74 = vmatmul.mubr.bf16.gmra.mrb[0].mxu0 %v39
  %v75 = vpop.f32.mrb[0].mxu0
  %v76 = vadd.f32 %v29, %v75
  %v77 = vpop.f32.mrb[0].mxu0
  %v78 = vpop.f32.mrb[0].mxu0
  %v79 = vpop.f32.mrb[0].mxu0
  %80 = vdwg.mxu0
  %v81 = vmax.f32 %v76, 0.0
  %v82 = vpack.c.bf16 %v81, %v81
  %v83 = vld [vmem:[%s3] sm:$0xf]
  %v84 = vld [vmem:[%s3 + $0x4] sm:$0xf]
  %v85 = vld [vmem:[%s3 + $0x8] sm:$0xf]
  %v86 = vld [vmem:[%s3 + $0xc] sm:$0xf]
  %v87 = vld [vmem:[%s4] sm:$0x1]
  %v89 = vlaneseq
  %v90 = vshrl.u32 %v89, 7
  %v91 = vsub.s32 0, %v90
  %v92 = vrot.slane %v87, %v91
  %v98 = vunpack.c.l.b16 %v83
  %v99 = vunpack.c.l.b16 %v84
  %v100 = vunpack.c.l.b16 %v85
  %v101 = vunpack.c.l.b16 %v86
  %v102 = vpack.c.b16 %v99, %v98
  %v103 = vpack.c.b16 %v101, %v100
  %vm106 = vcmask 261120
  %v108 = vsel %vm106, %v82, 0
  %110 = vmatprep.subr.bf16.mxu0 0
  %111 = vmatpush1.bf16.msra.mxu0 %v102
  %112 = vmatprep.subr.bf16.mxu0 0
  %113 = vmatpush1.bf16.msra.mxu0 %v103
  %114 = vmatprep.subr.bf16.mxu0 0
  %115 = vmatpush1.bf16.msra.mxu0 0
  %116 = vmatprep.subr.bf16.mxu0 0
  %117 = vmatpush1.bf16.msra.mxu0 0
  %118 = vmatprep.subr.bf16.mxu0 0
  %119 = vmatpush1.bf16.msra.mxu0 0
  %120 = vmatprep.subr.bf16.mxu0 0
  %121 = vmatpush1.bf16.msra.mxu0 0
  %122 = vmatprep.subr.bf16.mxu0 0
  %123 = vmatpush1.bf16.msra.mxu0 0
  %124 = vmatprep.subr.bf16.mxu0 0
  %125 = vmatpush1.bf16.msra.mxu0 0
  %126 = vmatprep.subr.bf16.mxu0 0
  %127 = vmatpush1.bf16.msra.mxu0 0
  %128 = vmatprep.subr.bf16.mxu0 0
  %129 = vmatpush1.bf16.msra.mxu0 0
  %130 = vmatprep.subr.bf16.mxu0 0
  %131 = vmatpush1.bf16.msra.mxu0 0
  %132 = vmatprep.subr.bf16.mxu0 0
  %133 = vmatpush1.bf16.msra.mxu0 0
  %134 = vmatprep.subr.bf16.mxu0 0
  %135 = vmatpush1.bf16.msra.mxu0 0
  %136 = vmatprep.subr.bf16.mxu0 0
  %137 = vmatpush1.bf16.msra.mxu0 0
  %138 = vmatprep.subr.bf16.mxu0 0
  %139 = vmatpush1.bf16.msra.mxu0 0
  %140 = vmatprep.subr.bf16.mxu0 0
  %141 = vmatpush1.bf16.msra.mxu0 0
  %142 = vmatprep.mubr.bf16.mxu0 0
  %143 = vmatmul.mubr.bf16.gmra.mrb[0].mxu0 %v108
  %v144 = vpop.f32.mrb[0].mxu0
  %v145 = vadd.f32 %v92, %v144
  %v146 = vpop.f32.mrb[0].mxu0
  %v147 = vpop.f32.mrb[0].mxu0
  %v148 = vpop.f32.mrb[0].mxu0
  %149 = vdwg.mxu0
  %vm150 = vcmask 64512
  %v151 = vsel %vm150, %v145, -inf
  %152 = vmax.xlane.f32.xlu0 %v151
  %v153 = vpop.xlane.xlu0 %152
  %v154 = vsub.f32 %v145, %v153
  %v155 = vmul.f32 %v154, 1.442695
  %v156 = vpow.pop %v155
  %v157 = vsel %vm150, %v156, 0.0
  %158 = vadd.xlane.f32.xlu0 %v157
  %v159 = vpop.xlane.xlu0 %158
  %v160 = vrcp.pop %v159
  %v161 = vmul.f32 %v156, %v160
  %162 = vst.msk [vmem:[%s5] sm:$0xff] %vm150, %v161
  // Predicated region
  $region22: #{actor_forward.1} parent=0 // pred_check
    _
  $region23: #{actor_forward.1} parent=0 // pred_check_branch
    %164 = sbr.rel (0) target = $region25
  $region24: #{actor_forward.1} parent=0 // pred_region
    _
  $region25: #{actor_forward.1} parent=0 // pred_fallthru
    _
  // Predicated region
  $region26: #{actor_forward.1} parent=0 // pred_check
    _
  $region27: #{actor_forward.1} parent=0 // pred_check_branch
    %166 = sbr.rel (0) target = $region29
  $region28: #{actor_forward.1} parent=0 // pred_region
    _
  $region29: #{actor_forward.1} parent=0 // pred_fallthru
    _

</llo_original>
